<compile_context>
chip_gen: v7x
topology: tpu7x:2x2x1
jax: 0.10.0
libtpu: 0.0.40
codegen_flags: <defaults>
</compile_context>

<pallas_src>
import functools

import jax
import jax.numpy as jnp
from jax.experimental import pallas as pl
from jax.experimental.pallas import tpu as pltpu

NUM_POS_FEATS = 64
TEMPERATURE = 10000.0


# --------------------------------------------------------------------------- #
# Kernel
# --------------------------------------------------------------------------- #
def _mlp2d_kernel(num_mlp_layers, x_ref, sigma_ref, pec_ref,
                  w0x_ref, w0pe_ref, b0_ref, *rest):
    """Feature-major MLP2D forward for one batch tile.

    x_ref     : (2, TB)  f32   input points (feature-major)
    sigma_ref : (1, TB)  f32   noise level per column
    pec_ref   : (64, 2)  f32   col 0 = 1/dim_t, col 1 = (k%2)*pi/2 phase
    w0x_ref   : (H, 2)   f32   folded   (w_pos @ W0_top)^T
    w0pe_ref  : (H, 64)  bf16  W0_bottom^T
    b0_ref    : (H, 1)   f32   folded layer-0 bias
    rest      : (w1, b1, ..., w_{L-1}, b_{L-1}, out_ref)
                w_l : (out, in) bf16, b_l : (out, 1) f32, out_ref : (2, TB) f32
    """
    layer_refs = rest[:-1]
    out_ref = rest[-1]

    x = x_ref[...]          # (2, TB)
    sigma = sigma_ref[...]  # (1, TB)

    inv_dim_t = pec_ref[:, 0:1]   # (64, 1)
    phase = pec_ref[:, 1:2]       # (64, 1)

    # Positional encoding: even rows sin, odd rows cos, via one sin() call.
    pe = jnp.sin(sigma * inv_dim_t + phase)                       # (64, TB) f32

    # Layer 0 with linpos folded in: K=2 part on the VPU, K=64 part on the MXU.
    w0x = w0x_ref[...]                                            # (H, 2)
    h = (w0x[:, 0:1] * x[0:1, :]
         + w0x[:, 1:2] * x[1:2, :]
         + jnp.dot(w0pe_ref[...], pe.astype(w0pe_ref.dtype),
                   preferred_element_type=jnp.float32)
         + b0_ref[...])                                           # (H, TB) f32
    h = jnp.maximum(h, 0.0)                                       # ReLU after layer 0

    # Remaining layers: ReLU after every layer except the last.
    for l in range(num_mlp_layers - 1):
        w = layer_refs[2 * l][...]        # (out, in) bf16
        b = layer_refs[2 * l + 1][...]    # (out, 1)  f32
        h = jnp.dot(w, h.astype(w.dtype),
                    preferred_element_type=jnp.float32) + b
        if l < num_mlp_layers - 2:
            h = jnp.maximum(h, 0.0)

    out_ref[...] = h.astype(out_ref.dtype)                        # (2, TB)


# --------------------------------------------------------------------------- #
# Host-side constants / parameter packing
# --------------------------------------------------------------------------- #
def make_dim_t():
    k = jnp.arange(NUM_POS_FEATS)
    exponent = 2.0 * (k // 2) / NUM_POS_FEATS
    return jnp.power(TEMPERATURE, exponent).astype(jnp.float32).reshape(1, NUM_POS_FEATS)


def make_pe_consts():
    """(64, 2): column 0 = 1/dim_t, column 1 = (k % 2) * pi/2 phase offset."""
    k = jnp.arange(NUM_POS_FEATS)
    dim_t = jnp.power(TEMPERATURE, 2.0 * (k // 2) / NUM_POS_FEATS)
    inv_dim_t = (1.0 / dim_t).astype(jnp.float32)
    phase = (k % 2).astype(jnp.float32) * (jnp.pi / 2.0)
    return jnp.stack([inv_dim_t, phase], axis=1)


def _pack_params(params):
    """Fold linpos into layer 0 and transpose everything to feature-major."""
    w_pos, b_pos = params["linpos"]                 # (2,64), (1,64) f32
    mlp = params["mlp"]
    W0, b0 = mlp[0]                                 # (128,H), (1,H) f32
    W0_top = W0[:NUM_POS_FEATS]                     # (64, H)  multiplies linpos
    W0_bot = W0[NUM_POS_FEATS:]                     # (64, H)  multiplies PE

    w0x_T = (w_pos @ W0_top).T.astype(jnp.float32)          # (H, 2)
    b0_T = (b0 + b_pos @ W0_top).T.astype(jnp.float32)      # (H, 1)
    w0pe_T = W0_bot.T.astype(jnp.bfloat16)                  # (H, 64)

    rest = []
    for w, b in mlp[1:]:
        rest.append(w.T.astype(jnp.bfloat16))               # (out, in)
        rest.append(b.T.astype(jnp.float32))                # (out, 1)
    return w0x_T, w0pe_T, b0_T, rest


def init_params(key, hidden_dim, num_layers):
    """Deterministic init mimicking nn.Linear default (U(-1/sqrt(fan_in), ...))."""
    def linear(key, fan_in, fan_out):
        kw, kb = jax.random.split(key)
        bound = 1.0 / jnp.sqrt(fan_in)
        w = jax.random.uniform(kw, (fan_in, fan_out), jnp.float32, -bound, bound)
        b = jax.random.uniform(kb, (1, fan_out), jnp.float32, -bound, bound)
        return w, b

    keys = jax.random.split(key, num_layers + 1)
    w_pos, b_pos = linear(keys[0], 2, NUM_POS_FEATS)

    mlp = []
    dims = [2 * NUM_POS_FEATS] + [hidden_dim] * (num_layers - 1) + [2]
    for i in range(num_layers):
        mlp.append(linear(keys[i + 1], dims[i], dims[i + 1]))
    return {"linpos": (w_pos, b_pos), "mlp": mlp}


# --------------------------------------------------------------------------- #
# Pallas wrapper
# --------------------------------------------------------------------------- #
def mlp2d_forward(x, sigma, params, *, tb=512):
    B = x.shape[0]
    hidden_dim = params["mlp"][0][0].shape[1]
    num_mlp_layers = len(params["mlp"])

    # Batch lives on the lane axis -> tile must be a multiple of 128.
    tb = max(128, min(tb, -(-B // 128) * 128))
    Bp = -(-B // tb) * tb
    num_blocks = Bp // tb

    # Feature-major, zero-padded inputs (padded columns are discarded on output).
    x_t = jnp.zeros((2, Bp), jnp.float32).at[:, :B].set(x.T)
    s_t = jnp.zeros((1, Bp), jnp.float32).at[:, :B].set(sigma.T)

    pe_c = make_pe_consts()
    w0x_T, w0pe_T, b0_T, rest = _pack_params(params)
    H = hidden_dim

    def const_spec(shape):
        return pl.BlockSpec(shape, lambda i: (0, 0))   # resident across grid steps

    in_specs = [
        pl.BlockSpec((2, tb), lambda i: (0, i)),       # x
        pl.BlockSpec((1, tb), lambda i: (0, i)),       # sigma
        const_spec((NUM_POS_FEATS, 2)),                # PE constants
        const_spec((H, 2)),                            # folded linpos weights
        const_spec((H, NUM_POS_FEATS)),                # layer-0 PE weights
        const_spec((H, 1)),                            # folded layer-0 bias
    ]
    args = [x_t, s_t, pe_c, w0x_T, w0pe_T, b0_T]
    for arr in rest:
        in_specs.append(const_spec(arr.shape))
        args.append(arr)

    out_t = pl.pallas_call(
        functools.partial(_mlp2d_kernel, num_mlp_layers),
        grid=(num_blocks,),
        in_specs=in_specs,
        out_specs=pl.BlockSpec((2, tb), lambda i: (0, i)),
        out_shape=jax.ShapeDtypeStruct((2, Bp), jnp.float32),
        compiler_params=pltpu.CompilerParams(
            dimension_semantics=("parallel",)),
    )(*args)

    return out_t[:, :B].T                               # (B, 2)


# --------------------------------------------------------------------------- #
# Pure-JAX reference (PyTorch semantics, all f32)
# --------------------------------------------------------------------------- #
def mlp2d_reference(x, sigma, params):
    w_pos, b_pos = params["linpos"]
    dim_t = make_dim_t()
    linpos = x @ w_pos + b_pos[0]
    pos_x = sigma / dim_t                                  # (B, 64)
    pe = jnp.stack([jnp.sin(pos_x[:, 0::2]),
                    jnp.cos(pos_x[:, 1::2])], axis=2).reshape(x.shape[0], -1)
    h = jnp.concatenate([linpos, pe], axis=1)
    mlp = params["mlp"]
    for i, (w, b) in enumerate(mlp):
        h = h @ w + b[0]
        if i < len(mlp) - 1:
            h = jnp.maximum(h, 0.0)
    return h


if __name__ == "__main__":
    B = 8
    HIDDEN_DIM = 32
    NUM_LAYERS = 3   # MLP2D(hidden_dim=32, num_layers=3)

    key = jax.random.PRNGKey(0)
    k_params, k_x, k_sigma = jax.random.split(key, 3)

    params = init_params(k_params, HIDDEN_DIM, NUM_LAYERS)
    x = jax.random.normal(k_x, (B, 2), jnp.float32)
    sigma = jax.random.uniform(k_sigma, (B, 1), jnp.float32, 0.01, 1.0)

    out = mlp2d_forward(x, sigma, params)
    out = jax.block_until_ready(out)

    ref = mlp2d_reference(x, sigma, params)
    assert out.shape == (B, 2)
    # bf16 MXU operands (f32 accumulate) + folded layer 0 -> loosened tolerance.
    assert jnp.allclose(out, ref, rtol=5e-2, atol=5e-2), (out, ref)

    print("KERNEL_OK")
</pallas_src>

<mosaic_0001>
module attributes {stable_mosaic.version = 11 : i64} {
  func.func @_mlp2d_kernel(%arg0: i32, %arg1: memref<2x128xf32, #tpu.memory_space<vmem>>, %arg2: memref<1x128xf32, #tpu.memory_space<vmem>>, %arg3: memref<64x2xf32, #tpu.memory_space<vmem>>, %arg4: memref<32x2xf32, #tpu.memory_space<vmem>>, %arg5: memref<32x64xbf16, #tpu.memory_space<vmem>>, %arg6: memref<32x1xf32, #tpu.memory_space<vmem>>, %arg7: memref<32x32xbf16, #tpu.memory_space<vmem>>, %arg8: memref<32x1xf32, #tpu.memory_space<vmem>>, %arg9: memref<2x32xbf16, #tpu.memory_space<vmem>>, %arg10: memref<2x1xf32, #tpu.memory_space<vmem>>, %arg11: memref<2x128xf32, #tpu.memory_space<vmem>>) attributes {dimension_semantics = [#tpu.dimension_semantics<parallel>], iteration_bounds = array<i64: 1>, scalar_prefetch = 0 : i64, scratch_operands = 0 : i64, tpu.core_type = #tpu.core_type<tc>, window_params = [{transform_indices = @transform_0, window_bounds = array<i64: 2, 128>}, {transform_indices = @transform_1, window_bounds = array<i64: 1, 128>}, {pipeline_mode = #tpu.pipeline_mode<synchronous>, transform_indices = @transform_2, window_bounds = array<i64: 64, 2>}, {pipeline_mode = #tpu.pipeline_mode<synchronous>, transform_indices = @transform_3, window_bounds = array<i64: 32, 2>}, {pipeline_mode = #tpu.pipeline_mode<synchronous>, transform_indices = @transform_4, window_bounds = array<i64: 32, 64>}, {pipeline_mode = #tpu.pipeline_mode<synchronous>, transform_indices = @transform_5, window_bounds = array<i64: 32, 1>}, {pipeline_mode = #tpu.pipeline_mode<synchronous>, transform_indices = @transform_6, window_bounds = array<i64: 32, 32>}, {pipeline_mode = #tpu.pipeline_mode<synchronous>, transform_indices = @transform_7, window_bounds = array<i64: 32, 1>}, {pipeline_mode = #tpu.pipeline_mode<synchronous>, transform_indices = @transform_8, window_bounds = array<i64: 2, 32>}, {pipeline_mode = #tpu.pipeline_mode<synchronous>, transform_indices = @transform_9, window_bounds = array<i64: 2, 1>}, {transform_indices = @transform_10, window_bounds = array<i64: 2, 128>}]} {
    %c0 = arith.constant 0 : index
    %c0_0 = arith.constant 0 : index
    %0 = vector.load %arg1[%c0, %c0_0] : memref<2x128xf32, #tpu.memory_space<vmem>>, vector<2x128xf32>
    %c0_1 = arith.constant 0 : index
    %c0_2 = arith.constant 0 : index
    %1 = vector.load %arg2[%c0_1, %c0_2] : memref<1x128xf32, #tpu.memory_space<vmem>>, vector<1x128xf32>
    %c0_3 = arith.constant 0 : index
    %c0_4 = arith.constant 0 : index
    %2 = vector.load %arg3[%c0_3, %c0_4] : memref<64x2xf32, #tpu.memory_space<vmem>>, vector<64x1xf32>
    %c0_5 = arith.constant 0 : index
    %c1 = arith.constant 1 : index
    %3 = vector.load %arg3[%c0_5, %c1] : memref<64x2xf32, #tpu.memory_space<vmem>>, vector<64x1xf32>
    %4 = vector.broadcast %1 : vector<1x128xf32> to vector<64x128xf32>
    %5 = vector.broadcast %2 : vector<64x1xf32> to vector<64x128xf32>
    %6 = arith.mulf %4, %5 : vector<64x128xf32>
    %7 = vector.broadcast %3 : vector<64x1xf32> to vector<64x128xf32>
    %8 = arith.addf %6, %7 : vector<64x128xf32>
    %9 = math.sin %8 : vector<64x128xf32>
    %c0_6 = arith.constant 0 : index
    %c0_7 = arith.constant 0 : index
    %10 = vector.load %arg4[%c0_6, %c0_7] : memref<32x2xf32, #tpu.memory_space<vmem>>, vector<32x2xf32>
    %11 = vector.extract_strided_slice %10 {offsets = [0, 0], sizes = [32, 1], strides = [1, 1]} : vector<32x2xf32> to vector<32x1xf32>
    %12 = vector.extract_strided_slice %0 {offsets = [0, 0], sizes = [1, 128], strides = [1, 1]} : vector<2x128xf32> to vector<1x128xf32>
    %13 = vector.broadcast %11 : vector<32x1xf32> to vector<32x128xf32>
    %14 = vector.broadcast %12 : vector<1x128xf32> to vector<32x128xf32>
    %15 = arith.mulf %13, %14 : vector<32x128xf32>
    %16 = vector.extract_strided_slice %10 {offsets = [0, 1], sizes = [32, 1], strides = [1, 1]} : vector<32x2xf32> to vector<32x1xf32>
    %17 = vector.extract_strided_slice %0 {offsets = [1, 0], sizes = [1, 128], strides = [1, 1]} : vector<2x128xf32> to vector<1x128xf32>
    %18 = vector.broadcast %16 : vector<32x1xf32> to vector<32x128xf32>
    %19 = vector.broadcast %17 : vector<1x128xf32> to vector<32x128xf32>
    %20 = arith.mulf %18, %19 : vector<32x128xf32>
    %21 = arith.addf %15, %20 : vector<32x128xf32>
    %c0_8 = arith.constant 0 : index
    %c0_9 = arith.constant 0 : index
    %22 = vector.load %arg5[%c0_8, %c0_9] : memref<32x64xbf16, #tpu.memory_space<vmem>>, vector<32x64xbf16>
    %23 = arith.truncf %9 : vector<64x128xf32> to vector<64x128xbf16>
    %cst = arith.constant dense<0.000000e+00> : vector<32x128xf32>
    %24 = tpu.matmul %22, %23, %cst {dimension_numbers = #tpu.dot_dimension_numbers<[1], [0], [0], [1], [0, 0, 1, 1], [], []>} : vector<32x64xbf16>, vector<64x128xbf16>, vector<32x128xf32> -> vector<32x128xf32>
    %25 = arith.addf %21, %24 : vector<32x128xf32>
    %c0_10 = arith.constant 0 : index
    %c0_11 = arith.constant 0 : index
    %26 = vector.load %arg6[%c0_10, %c0_11] : memref<32x1xf32, #tpu.memory_space<vmem>>, vector<32x1xf32>
    %27 = vector.broadcast %26 : vector<32x1xf32> to vector<32x128xf32>
    %28 = arith.addf %25, %27 : vector<32x128xf32>
    %cst_12 = arith.constant 0.000000e+00 : f32
    %29 = vector.broadcast %cst_12 : f32 to vector<32x128xf32>
    %30 = arith.maximumf %28, %29 : vector<32x128xf32>
    %c0_13 = arith.constant 0 : index
    %c0_14 = arith.constant 0 : index
    %31 = vector.load %arg7[%c0_13, %c0_14] : memref<32x32xbf16, #tpu.memory_space<vmem>>, vector<32x32xbf16>
    %c0_15 = arith.constant 0 : index
    %c0_16 = arith.constant 0 : index
    %32 = vector.load %arg8[%c0_15, %c0_16] : memref<32x1xf32, #tpu.memory_space<vmem>>, vector<32x1xf32>
    %33 = arith.truncf %30 : vector<32x128xf32> to vector<32x128xbf16>
    %cst_17 = arith.constant dense<0.000000e+00> : vector<32x128xf32>
    %34 = tpu.matmul %31, %33, %cst_17 {dimension_numbers = #tpu.dot_dimension_numbers<[1], [0], [0], [1], [0, 0, 1, 1], [], []>} : vector<32x32xbf16>, vector<32x128xbf16>, vector<32x128xf32> -> vector<32x128xf32>
    %35 = vector.broadcast %32 : vector<32x1xf32> to vector<32x128xf32>
    %36 = arith.addf %34, %35 : vector<32x128xf32>
    %cst_18 = arith.constant 0.000000e+00 : f32
    %37 = vector.broadcast %cst_18 : f32 to vector<32x128xf32>
    %38 = arith.maximumf %36, %37 : vector<32x128xf32>
    %c0_19 = arith.constant 0 : index
    %c0_20 = arith.constant 0 : index
    %39 = vector.load %arg9[%c0_19, %c0_20] : memref<2x32xbf16, #tpu.memory_space<vmem>>, vector<2x32xbf16>
    %c0_21 = arith.constant 0 : index
    %c0_22 = arith.constant 0 : index
    %40 = vector.load %arg10[%c0_21, %c0_22] : memref<2x1xf32, #tpu.memory_space<vmem>>, vector<2x1xf32>
    %41 = arith.truncf %38 : vector<32x128xf32> to vector<32x128xbf16>
    %cst_23 = arith.constant dense<0.000000e+00> : vector<2x128xf32>
    %42 = tpu.matmul %39, %41, %cst_23 {dimension_numbers = #tpu.dot_dimension_numbers<[1], [0], [0], [1], [0, 0, 1, 1], [], []>} : vector<2x32xbf16>, vector<32x128xbf16>, vector<2x128xf32> -> vector<2x128xf32>
    %43 = vector.broadcast %40 : vector<2x1xf32> to vector<2x128xf32>
    %44 = arith.addf %42, %43 : vector<2x128xf32>
    %c0_24 = arith.constant 0 : index
    %c0_25 = arith.constant 0 : index
    %45 = vector.load %arg11[%c0_24, %c0_25] : memref<2x128xf32, #tpu.memory_space<vmem>>, vector<2x128xf32>
    tpu.vector_store %arg11[%c0_24, %c0_25], %44 {strides = array<i32>} : memref<2x128xf32, #tpu.memory_space<vmem>>, vector<2x128xf32>,
    return
  }
  func.func @transform_0(%arg0: i32) -> (i32, i32) {
    %c0_i32 = arith.constant 0 : i32
    %c0_i32_0 = arith.constant 0 : i32
    return %c0_i32, %arg0 : i32, i32
  }
  func.func @transform_1(%arg0: i32) -> (i32, i32) {
    %c0_i32 = arith.constant 0 : i32
    %c0_i32_0 = arith.constant 0 : i32
    return %c0_i32, %arg0 : i32, i32
  }
  func.func @transform_2(%arg0: i32) -> (i32, i32) {
    %c0_i32 = arith.constant 0 : i32
    %c0_i32_0 = arith.constant 0 : i32
    %c0_i32_1 = arith.constant 0 : i32
    return %c0_i32, %c0_i32_0 : i32, i32
  }
  func.func @transform_3(%arg0: i32) -> (i32, i32) {
    %c0_i32 = arith.constant 0 : i32
    %c0_i32_0 = arith.constant 0 : i32
    %c0_i32_1 = arith.constant 0 : i32
    return %c0_i32, %c0_i32_0 : i32, i32
  }
  func.func @transform_4(%arg0: i32) -> (i32, i32) {
    %c0_i32 = arith.constant 0 : i32
    %c0_i32_0 = arith.constant 0 : i32
    %c0_i32_1 = arith.constant 0 : i32
    return %c0_i32, %c0_i32_0 : i32, i32
  }
  func.func @transform_5(%arg0: i32) -> (i32, i32) {
    %c0_i32 = arith.constant 0 : i32
    %c0_i32_0 = arith.constant 0 : i32
    %c0_i32_1 = arith.constant 0 : i32
    return %c0_i32, %c0_i32_0 : i32, i32
  }
  func.func @transform_6(%arg0: i32) -> (i32, i32) {
    %c0_i32 = arith.constant 0 : i32
    %c0_i32_0 = arith.constant 0 : i32
    %c0_i32_1 = arith.constant 0 : i32
    return %c0_i32, %c0_i32_0 : i32, i32
  }
  func.func @transform_7(%arg0: i32) -> (i32, i32) {
    %c0_i32 = arith.constant 0 : i32
    %c0_i32_0 = arith.constant 0 : i32
    %c0_i32_1 = arith.constant 0 : i32
    return %c0_i32, %c0_i32_0 : i32, i32
  }
  func.func @transform_8(%arg0: i32) -> (i32, i32) {
    %c0_i32 = arith.constant 0 : i32
    %c0_i32_0 = arith.constant 0 : i32
    %c0_i32_1 = arith.constant 0 : i32
    return %c0_i32, %c0_i32_0 : i32, i32
  }
  func.func @transform_9(%arg0: i32) -> (i32, i32) {
    %c0_i32 = arith.constant 0 : i32
    %c0_i32_0 = arith.constant 0 : i32
    %c0_i32_1 = arith.constant 0 : i32
    return %c0_i32, %c0_i32_0 : i32, i32
  }
  func.func @transform_10(%arg0: i32) -> (i32, i32) {
    %c0_i32 = arith.constant 0 : i32
    %c0_i32_0 = arith.constant 0 : i32
    return %c0_i32, %arg0 : i32, i32
  }
}

</mosaic_0001>

<llo_original>
// kernel: tpu_custom_call.1
$region0: #{tpu_custom_call.1}
  #allocation0 [shape = 'u32[]', space=smem, size = 0x4, offset = 0x4, fixed_abs, tag = 'smem constant byte address 0x4 - core index']
  #allocation1 [shape = 'u32[144,128]{1,0:T(1,128)}', space=vmem, size = 0x12000, scoped, tag = 'internal scratch']
  %s0 = inlined_call_operand.vmem [shape: f32[2,128], index: 0, kind: input, shape index: {}]
  %s1 = inlined_call_operand.vmem [shape: f32[1,128], index: 1, kind: input, shape index: {}]
  %s2 = inlined_call_operand.vmem [shape: f32[64,2], index: 2, kind: input, shape index: {}]
  %s3 = inlined_call_operand.vmem [shape: f32[32,2], index: 3, kind: input, shape index: {}]
  %s4 = inlined_call_operand.vmem [shape: bf16[32,64], index: 4, kind: input, shape index: {}]
  %s5 = inlined_call_operand.vmem [shape: f32[32,1], index: 5, kind: input, shape index: {}]
  %s6 = inlined_call_operand.vmem [shape: bf16[32,32], index: 6, kind: input, shape index: {}]
  %s7 = inlined_call_operand.vmem [shape: f32[32,1], index: 7, kind: input, shape index: {}]
  %s8 = inlined_call_operand.vmem [shape: bf16[2,32], index: 8, kind: input, shape index: {}]
  %s9 = inlined_call_operand.vmem [shape: f32[2,1], index: 9, kind: input, shape index: {}]
  %s10 = inlined_call_operand.hbm [shape: f32[2,128], index: 10, kind: output, shape index: {}]
  %s11 = sld [smem:[#allocation0]]
  $region50: #{tpu_custom_call.1} parent=0
    _
  %s13 = ssub.s32 1, %s11
  %s14 = scalar_select 0, %s13, %s11
  $region1: #{tpu_custom_call.1} parent=0
    #allocation2 [shape = 'u8[1024]{0}', space=vmem, size = 0x400, scoped, tag = 'output window, operand 0, single buffered']
    #allocation3 [shape = 's32[1]{0}', space=sflag, size = 0x4, scoped, tag = 'scoped memory for tpu_custom_call.1']
    %15 = vsyncpa [#allocation3], 0
    // Predicated region
    $region2: #{tpu_custom_call.1} parent=1 // pred_check
      _
    $region3: #{tpu_custom_call.1} parent=1 // pred_check_branch
      %17 = sbr.rel (0) target = $region5
    $region4: #{tpu_custom_call.1} parent=1 // pred_region
      _
    $region5: #{tpu_custom_call.1} parent=1 // pred_fallthru
      _
    // Predicated region
    $region6: #{tpu_custom_call.1} parent=1 // pred_check
      _
    $region7: #{tpu_custom_call.1} parent=1 // pred_check_branch
      %19 = sbr.rel (0) target = $region9
    $region8: #{tpu_custom_call.1} parent=1 // pred_region
      _
    $region9: #{tpu_custom_call.1} parent=1 // pred_fallthru
      _
    // Predicated region
    $region10: #{tpu_custom_call.1} parent=1 // pred_check
      _
    $region11: #{tpu_custom_call.1} parent=1 // pred_check_branch
      %21 = sbr.rel (0) target = $region13
    $region12: #{tpu_custom_call.1} parent=1 // pred_region
      _
    $region13: #{tpu_custom_call.1} parent=1 // pred_fallthru
      _
    // Predicated region
    $region14: #{tpu_custom_call.1} parent=1 // pred_check
      _
    $region15: #{tpu_custom_call.1} parent=1 // pred_check_branch
      %23 = sbr.rel (0) target = $region17
    $region16: #{tpu_custom_call.1} parent=1 // pred_region
      _
    $region17: #{tpu_custom_call.1} parent=1 // pred_fallthru
      _
    // Predicated region
    $region18: #{tpu_custom_call.1} parent=1 // pred_check
      _
    $region19: #{tpu_custom_call.1} parent=1 // pred_check_branch
      %25 = sbr.rel (0) target = $region21
    $region20: #{tpu_custom_call.1} parent=1 // pred_region
      _
    $region21: #{tpu_custom_call.1} parent=1 // pred_fallthru
      _
    // Predicated region
    $region22: #{tpu_custom_call.1} parent=1 // pred_check
      _
    $region23: #{tpu_custom_call.1} parent=1 // pred_check_branch
      %27 = sbr.rel (0) target = $region25
    $region24: #{tpu_custom_call.1} parent=1 // pred_region
      _
    $region25: #{tpu_custom_call.1} parent=1 // pred_fallthru
      _
    // Predicated region
    $region26: #{tpu_custom_call.1} parent=1 // pred_check
      _
    $region27: #{tpu_custom_call.1} parent=1 // pred_check_branch
      %29 = sbr.rel (0) target = $region29
    $region28: #{tpu_custom_call.1} parent=1 // pred_region
      _
    $region29: #{tpu_custom_call.1} parent=1 // pred_fallthru
      _
    // Predicated region
    $region30: #{tpu_custom_call.1} parent=1 // pred_check
      _
    $region31: #{tpu_custom_call.1} parent=1 // pred_check_branch
      %31 = sbr.rel (0) target = $region33
    $region32: #{tpu_custom_call.1} parent=1 // pred_region
      _
    $region33: #{tpu_custom_call.1} parent=1 // pred_fallthru
      _
    // Predicated region
    $region34: #{tpu_custom_call.1} parent=1 // pred_check
      _
    $region35: #{tpu_custom_call.1} parent=1 // pred_check_branch
      %33 = sbr.rel (0) target = $region37
    $region36: #{tpu_custom_call.1} parent=1 // pred_region
      _
    $region37: #{tpu_custom_call.1} parent=1 // pred_fallthru
      _
    // Predicated region
    $region38: #{tpu_custom_call.1} parent=1 // pred_check
      _
    $region39: #{tpu_custom_call.1} parent=1 // pred_check_branch
      %35 = sbr.rel (0) target = $region41
    $region40: #{tpu_custom_call.1} parent=1 // pred_region
      _
    $region41: #{tpu_custom_call.1} parent=1 // pred_fallthru
      _
    %v37 = vld [vmem:[%s0] sm:$0x3]
    %v38 = vld [vmem:[%s1] sm:$0x1]
    %v39 = vld [vmem:[%s2] sm:$0xff]
    %v40 = vld [vmem:[%s2 + $0x8] sm:$0xff]
    %v41 = vld [vmem:[%s2 + $0x10] sm:$0xff]
    %v42 = vld [vmem:[%s2 + $0x18] sm:$0xff]
    %v43 = vld [vmem:[%s2 + $0x20] sm:$0xff]
    %v44 = vld [vmem:[%s2 + $0x28] sm:$0xff]
    %v45 = vld [vmem:[%s2 + $0x30] sm:$0xff]
    %v46 = vld [vmem:[%s2 + $0x38] sm:$0xff]
    %v48 = vlaneseq
    %v49 = vshrl.u32 %v48, 7
    %v50 = vsub.s32 0, %v49
    %v51 = vrot.slane %v38, %v50
    %54 = vset.pattern.permute.xlu0 0
    %55 = vperm.xlu0 %54, %v39
    %v56 = vpop.permute.xlu0 %55
    %59 = vset.pattern.permute.xlu0 0
    %60 = vperm.xlu0 %59, %v40
    %v61 = vpop.permute.xlu0 %60
    %64 = vset.pattern.permute.xlu0 0
    %65 = vperm.xlu0 %64, %v41
    %v66 = vpop.permute.xlu0 %65
    %69 = vset.pattern.permute.xlu0 0
    %70 = vperm.xlu0 %69, %v42
    %v71 = vpop.permute.xlu0 %70
    %74 = vset.pattern.permute.xlu0 0
    %75 = vperm.xlu0 %74, %v43
    %v76 = vpop.permute.xlu0 %75
    %79 = vset.pattern.permute.xlu0 0
    %80 = vperm.xlu0 %79, %v44
    %v81 = vpop.permute.xlu0 %80
    %84 = vset.pattern.permute.xlu0 0
    %85 = vperm.xlu0 %84, %v45
    %v86 = vpop.permute.xlu0 %85
    %89 = vset.pattern.permute.xlu0 0
    %90 = vperm.xlu0 %89, %v46
    %v91 = vpop.permute.xlu0 %90
    %v93 = vmul.f32 %v51, %v56
    %v94 = vmul.f32 %v51, %v61
    %v95 = vmul.f32 %v51, %v66
    %v96 = vmul.f32 %v51, %v71
    %v97 = vmul.f32 %v51, %v76
    %v98 = vmul.f32 %v51, %v81
    %v99 = vmul.f32 %v51, %v86
    %v100 = vmul.f32 %v51, %v91
    %101 = vset.pattern.permute.xlu0 1
    %102 = vperm.xlu0 %101, %v39
    %v103 = vpop.permute.xlu0 %102
    %105 = vset.pattern.permute.xlu0 1
    %106 = vperm.xlu0 %105, %v40
    %v107 = vpop.permute.xlu0 %106
    %109 = vset.pattern.permute.xlu0 1
    %110 = vperm.xlu0 %109, %v41
    %v111 = vpop.permute.xlu0 %110
    %113 = vset.pattern.permute.xlu0 1
    %114 = vperm.xlu0 %113, %v42
    %v115 = vpop.permute.xlu0 %114
    %117 = vset.pattern.permute.xlu0 1
    %118 = vperm.xlu0 %117, %v43
    %v119 = vpop.permute.xlu0 %118
    %121 = vset.pattern.permute.xlu0 1
    %122 = vperm.xlu0 %121, %v44
    %v123 = vpop.permute.xlu0 %122
    %125 = vset.pattern.permute.xlu0 1
    %126 = vperm.xlu0 %125, %v45
    %v127 = vpop.permute.xlu0 %126
    %129 = vset.pattern.permute.xlu0 1
    %130 = vperm.xlu0 %129, %v46
    %v131 = vpop.permute.xlu0 %130
    %v133 = vadd.f32 %v93, %v103
    %v134 = vadd.f32 %v94, %v107
    %v135 = vadd.f32 %v95, %v111
    %v136 = vadd.f32 %v96, %v115
    %v137 = vadd.f32 %v97, %v119
    %v138 = vadd.f32 %v98, %v123
    %v139 = vadd.f32 %v99, %v127
    %v140 = vadd.f32 %v100, %v131
    %v141 = vand.u32 2147483647, %v133
    %vm142 = vcmp.le.f32.partialorder %v141, 0.7853982
    %vm143 = vcmp.lt.s32.totalorder %v133, 0
    %v144 = vand.u32 %v133, 2139095040
    %v145 = vshrl.u32 %v144, 23
    %v146 = vsub.s32 %v145, 127
    %v147 = vand.u32 2147483647, %v133
    %v148 = vand.u32 %v147, 8388607
    %v149 = vor.u32 %v148, 8388608
    %v150 = vsub.s32 0, %v149
    %v151 = vadd.s32 %v146, 1
    %vm152 = vcmp.gt.s32.totalorder %v151, 0
    %v153 = vsel %vm152, %v151, 0
    %v154 = vshrl.u32 %v153, 5
    %v155 = vand.u32 %v153, 31
    %v156 = vsub.s32 32, %v155
    %v157 = vshrl.u32 683565275, %v156
    %v158 = vshll.u32 683565275, %v155
    %v159 = vshrl.u32 2475754826, %v156
    %v160 = vor.u32 %v158, %v159
    %v161 = vshll.u32 2475754826, %v155
    %v162 = vshrl.u32 2131351028, %v156
    %v163 = vor.u32 %v161, %v162
    %v164 = vshll.u32 2131351028, %v155
    %v165 = vshrl.u32 2102212464, %v156
    %v166 = vor.u32 %v164, %v165
    %v167 = vshll.u32 2102212464, %v155
    %v168 = vshrl.u32 920167782, %v156
    %v169 = vor.u32 %v167, %v168
    %v170 = vshll.u32 920167782, %v155
    %v171 = vshrl.u32 1326507024, %v156
    %v172 = vor.u32 %v170, %v171
    %vm173 = vcmp.lt.s32.totalorder %v154, 1
    %vm174 = vcmp.lt.s32.totalorder %v154, 2
    %vm175 = vcmp.lt.s32.totalorder %v154, 3
    %vm176 = vcmp.lt.s32.totalorder %v154, 4
    %v177 = vsel %vm173, %v157, %v160
    %v178 = vsel %vm176, %v166, 2102212464
    %v179 = vsel %vm175, %v163, %v178
    %v180 = vsel %vm174, %v177, %v179
    %v181 = vsel %vm173, %v160, %v163
    %v182 = vsel %vm176, %v169, 920167782
    %v183 = vsel %vm175, %v166, %v182
    %v184 = vsel %vm174, %v181, %v183
    %v185 = vsel %vm173, %v163, %v166
    %v186 = vsel %vm176, %v172, 1326507024
    %v187 = vsel %vm175, %v169, %v186
    %v188 = vsel %vm174, %v185, %v187
    %v189 = vshll.u32 %v149, 8
    %v190 = vmul.u32.u64.compose %v189, %v188
    %v191 = vextract.low.u32 %v190
    %v192 = vextract.high.u32 %v190
    %v193 = vmul.u32.u64.compose %v189, %v184
    %v194 = vextract.low.u32 %v193
    %v195 = vextract.high.u32 %v193
    %v196 = vmul.u32 %v189, %v180
    %v197 = vadd.s32 %v192, %v194
    %vm198 = vc.u32 %v192, %v194
    %v199 = vadd.s32 %v195, 1
    %v200 = vsel %vm198, %v199, %v195
    %v201 = vadd.s32 %v196, %v200
    %v202 = vadd.s32 %v201, 536870912
    %v203 = vshrl.u32 %v202, 30
    %v204 = vshll.u32 %v203, 30
    %v205 = vsub.s32 %v201, %v204
    %vm206 = vcmp.lt.s32.totalorder %v205, 0
    %v207 = vsub.s32 0, %v205
    %v208 = vsel %vm206, %v207, %v205
    %v209 = vclz %v208
    %v210 = vsub.s32 %v209, 2
    %vm211 = vcmp.gt.s32.totalorder 0, %v210
    %v212 = vsel %vm211, 0, %v210
    %v213 = vsub.s32 32, %v212
    %v214 = vshll.u32 %v205, %v212
    %v215 = vshrl.u32 %v197, %v213
    %v216 = vor.u32 %v214, %v215
    %v217 = vsub.s32 4294967266, %v212
    %v218 = vadd.s32 %v217, 127
    %v219 = vshll.u32 %v218, 23
    %v220 = vor.u32 4788187, %v219
    %v221 = vand.u32 2147483647, %v220
    %v223 = vcvt.s32.f32 %v216
    %v224 = vmul.f32 %v223, %v221
    %v225 = vxor.u32 %v224, 2147483648
    %v226 = vsel %vm143, %v225, %v224
    %v227 = vsub.s32 4, %v203
    %v228 = vsel %vm143, %v227, %v203
    %v229 = vsel %vm142, %v133, %v226
    %v230 = vsel %vm142, 0, %v228
    %v231 = vcosq.f32.pop %v229
    %v232 = vsinq.f32.pop %v229
    %vm233 = vweird.f32 %v133
    %v234 = vadd.s32 %v230, 3
    %v235 = vand.u32 %v234, 3
    %vm236 = vcmp.lt.s32.totalorder %v235, 2
    %vm237 = vcmp.eq.s32.totalorder %v235, 0
    %v238 = vxor.u32 %v232, 2147483648
    %v239 = vsel %vm237, %v231, %v238
    %vm240 = vcmp.eq.s32.totalorder %v235, 2
    %v241 = vxor.u32 %v231, 2147483648
    %v242 = vsel %vm240, %v241, %v232
    %v243 = vsel %vm236, %v239, %v242
    %v244 = vsel %vm233, nan, %v243
    %v245 = vand.u32 2147483647, %v134
    %vm246 = vcmp.le.f32.partialorder %v245, 0.7853982
    %vm247 = vcmp.lt.s32.totalorder %v134, 0
    %v248 = vand.u32 %v134, 2139095040
    %v249 = vshrl.u32 %v248, 23
    %v250 = vsub.s32 %v249, 127
    %v251 = vand.u32 2147483647, %v134
    %v252 = vand.u32 %v251, 8388607
    %v253 = vor.u32 %v252, 8388608
    %v254 = vsub.s32 0, %v253
    %v255 = vadd.s32 %v250, 1
    %vm256 = vcmp.gt.s32.totalorder %v255, 0
    %v257 = vsel %vm256, %v255, 0
    %v258 = vshrl.u32 %v257, 5
    %v259 = vand.u32 %v257, 31
    %v260 = vsub.s32 32, %v259
    %v261 = vshrl.u32 683565275, %v260
    %v262 = vshll.u32 683565275, %v259
    %v263 = vshrl.u32 2475754826, %v260
    %v264 = vor.u32 %v262, %v263
    %v265 = vshll.u32 2475754826, %v259
    %v266 = vshrl.u32 2131351028, %v260
    %v267 = vor.u32 %v265, %v266
    %v268 = vshll.u32 2131351028, %v259
    %v269 = vshrl.u32 2102212464, %v260
    %v270 = vor.u32 %v268, %v269
    %v271 = vshll.u32 2102212464, %v259
    %v272 = vshrl.u32 920167782, %v260
    %v273 = vor.u32 %v271, %v272
    %v274 = vshll.u32 920167782, %v259
    %v275 = vshrl.u32 1326507024, %v260
    %v276 = vor.u32 %v274, %v275
    %vm277 = vcmp.lt.s32.totalorder %v258, 1
    %vm278 = vcmp.lt.s32.totalorder %v258, 2
    %vm279 = vcmp.lt.s32.totalorder %v258, 3
    %vm280 = vcmp.lt.s32.totalorder %v258, 4
    %v281 = vsel %vm277, %v261, %v264
    %v282 = vsel %vm280, %v270, 2102212464
    %v283 = vsel %vm279, %v267, %v282
    %v284 = vsel %vm278, %v281, %v283
    %v285 = vsel %vm277, %v264, %v267
    %v286 = vsel %vm280, %v273, 920167782
    %v287 = vsel %vm279, %v270, %v286
    %v288 = vsel %vm278, %v285, %v287
    %v289 = vsel %vm277, %v267, %v270
    %v290 = vsel %vm280, %v276, 1326507024
    %v291 = vsel %vm279, %v273, %v290
    %v292 = vsel %vm278, %v289, %v291
    %v293 = vshll.u32 %v253, 8
    %v294 = vmul.u32.u64.compose %v293, %v292
    %v295 = vextract.low.u32 %v294
    %v296 = vextract.high.u32 %v294
    %v297 = vmul.u32.u64.compose %v293, %v288
    %v298 = vextract.low.u32 %v297
    %v299 = vextract.high.u32 %v297
    %v300 = vmul.u32 %v293, %v284
    %v301 = vadd.s32 %v296, %v298
    %vm302 = vc.u32 %v296, %v298
    %v303 = vadd.s32 %v299, 1
    %v304 = vsel %vm302, %v303, %v299
    %v305 = vadd.s32 %v300, %v304
    %v306 = vadd.s32 %v305, 536870912
    %v307 = vshrl.u32 %v306, 30
    %v308 = vshll.u32 %v307, 30
    %v309 = vsub.s32 %v305, %v308
    %vm310 = vcmp.lt.s32.totalorder %v309, 0
    %v311 = vsub.s32 0, %v309
    %v312 = vsel %vm310, %v311, %v309
    %v313 = vclz %v312
    %v314 = vsub.s32 %v313, 2
    %vm315 = vcmp.gt.s32.totalorder 0, %v314
    %v316 = vsel %vm315, 0, %v314
    %v317 = vsub.s32 32, %v316
    %v318 = vshll.u32 %v309, %v316
    %v319 = vshrl.u32 %v301, %v317
    %v320 = vor.u32 %v318, %v319
    %v321 = vsub.s32 4294967266, %v316
    %v322 = vadd.s32 %v321, 127
    %v323 = vshll.u32 %v322, 23
    %v324 = vor.u32 4788187, %v323
    %v325 = vand.u32 2147483647, %v324
    %v327 = vcvt.s32.f32 %v320
    %v328 = vmul.f32 %v327, %v325
    %v329 = vxor.u32 %v328, 2147483648
    %v330 = vsel %vm247, %v329, %v328
    %v331 = vsub.s32 4, %v307
    %v332 = vsel %vm247, %v331, %v307
    %v333 = vsel %vm246, %v134, %v330
    %v334 = vsel %vm246, 0, %v332
    %v335 = vcosq.f32.pop %v333
    %v336 = vsinq.f32.pop %v333
    %vm337 = vweird.f32 %v134
    %v338 = vadd.s32 %v334, 3
    %v339 = vand.u32 %v338, 3
    %vm340 = vcmp.lt.s32.totalorder %v339, 2
    %vm341 = vcmp.eq.s32.totalorder %v339, 0
    %v342 = vxor.u32 %v336, 2147483648
    %v343 = vsel %vm341, %v335, %v342
    %vm344 = vcmp.eq.s32.totalorder %v339, 2
    %v345 = vxor.u32 %v335, 2147483648
    %v346 = vsel %vm344, %v345, %v336
    %v347 = vsel %vm340, %v343, %v346
    %v348 = vsel %vm337, nan, %v347
    %v349 = vand.u32 2147483647, %v135
    %vm350 = vcmp.le.f32.partialorder %v349, 0.7853982
    %vm351 = vcmp.lt.s32.totalorder %v135, 0
    %v352 = vand.u32 %v135, 2139095040
    %v353 = vshrl.u32 %v352, 23
    %v354 = vsub.s32 %v353, 127
    %v355 = vand.u32 2147483647, %v135
    %v356 = vand.u32 %v355, 8388607
    %v357 = vor.u32 %v356, 8388608
    %v358 = vsub.s32 0, %v357
    %v359 = vadd.s32 %v354, 1
    %vm360 = vcmp.gt.s32.totalorder %v359, 0
    %v361 = vsel %vm360, %v359, 0
    %v362 = vshrl.u32 %v361, 5
    %v363 = vand.u32 %v361, 31
    %v364 = vsub.s32 32, %v363
    %v365 = vshrl.u32 683565275, %v364
    %v366 = vshll.u32 683565275, %v363
    %v367 = vshrl.u32 2475754826, %v364
    %v368 = vor.u32 %v366, %v367
    %v369 = vshll.u32 2475754826, %v363
    %v370 = vshrl.u32 2131351028, %v364
    %v371 = vor.u32 %v369, %v370
    %v372 = vshll.u32 2131351028, %v363
    %v373 = vshrl.u32 2102212464, %v364
    %v374 = vor.u32 %v372, %v373
    %v375 = vshll.u32 2102212464, %v363
    %v376 = vshrl.u32 920167782, %v364
    %v377 = vor.u32 %v375, %v376
    %v378 = vshll.u32 920167782, %v363
    %v379 = vshrl.u32 1326507024, %v364
    %v380 = vor.u32 %v378, %v379
    %vm381 = vcmp.lt.s32.totalorder %v362, 1
    %vm382 = vcmp.lt.s32.totalorder %v362, 2
    %vm383 = vcmp.lt.s32.totalorder %v362, 3
    %vm384 = vcmp.lt.s32.totalorder %v362, 4
    %v385 = vsel %vm381, %v365, %v368
    %v386 = vsel %vm384, %v374, 2102212464
    %v387 = vsel %vm383, %v371, %v386
    %v388 = vsel %vm382, %v385, %v387
    %v389 = vsel %vm381, %v368, %v371
    %v390 = vsel %vm384, %v377, 920167782
    %v391 = vsel %vm383, %v374, %v390
    %v392 = vsel %vm382, %v389, %v391
    %v393 = vsel %vm381, %v371, %v374
    %v394 = vsel %vm384, %v380, 1326507024
    %v395 = vsel %vm383, %v377, %v394
    %v396 = vsel %vm382, %v393, %v395
    %v397 = vshll.u32 %v357, 8
    %v398 = vmul.u32.u64.compose %v397, %v396
    %v399 = vextract.low.u32 %v398
    %v400 = vextract.high.u32 %v398
    %v401 = vmul.u32.u64.compose %v397, %v392
    %v402 = vextract.low.u32 %v401
    %v403 = vextract.high.u32 %v401
    %v404 = vmul.u32 %v397, %v388
    %v405 = vadd.s32 %v400, %v402
    %vm406 = vc.u32 %v400, %v402
    %v407 = vadd.s32 %v403, 1
    %v408 = vsel %vm406, %v407, %v403
    %v409 = vadd.s32 %v404, %v408
    %v410 = vadd.s32 %v409, 536870912
    %v411 = vshrl.u32 %v410, 30
    %v412 = vshll.u32 %v411, 30
    %v413 = vsub.s32 %v409, %v412
    %vm414 = vcmp.lt.s32.totalorder %v413, 0
    %v415 = vsub.s32 0, %v413
    %v416 = vsel %vm414, %v415, %v413
    %v417 = vclz %v416
    %v418 = vsub.s32 %v417, 2
    %vm419 = vcmp.gt.s32.totalorder 0, %v418
    %v420 = vsel %vm419, 0, %v418
    %v421 = vsub.s32 32, %v420
    %v422 = vshll.u32 %v413, %v420
    %v423 = vshrl.u32 %v405, %v421
    %v424 = vor.u32 %v422, %v423
    %v425 = vsub.s32 4294967266, %v420
    %v426 = vadd.s32 %v425, 127
    %v427 = vshll.u32 %v426, 23
    %v428 = vor.u32 4788187, %v427
    %v429 = vand.u32 2147483647, %v428
    %v431 = vcvt.s32.f32 %v424
    %v432 = vmul.f32 %v431, %v429
    %v433 = vxor.u32 %v432, 2147483648
    %v434 = vsel %vm351, %v433, %v432
    %v435 = vsub.s32 4, %v411
    %v436 = vsel %vm351, %v435, %v411
    %v437 = vsel %vm350, %v135, %v434
    %v438 = vsel %vm350, 0, %v436
    %v439 = vcosq.f32.pop %v437
    %v440 = vsinq.f32.pop %v437
    %vm441 = vweird.f32 %v135
    %v442 = vadd.s32 %v438, 3
    %v443 = vand.u32 %v442, 3
    %vm444 = vcmp.lt.s32.totalorder %v443, 2
    %vm445 = vcmp.eq.s32.totalorder %v443, 0
    %v446 = vxor.u32 %v440, 2147483648
    %v447 = vsel %vm445, %v439, %v446
    %vm448 = vcmp.eq.s32.totalorder %v443, 2
    %v449 = vxor.u32 %v439, 2147483648
    %v450 = vsel %vm448, %v449, %v440
    %v451 = vsel %vm444, %v447, %v450
    %v452 = vsel %vm441, nan, %v451
    %v453 = vand.u32 2147483647, %v136
    %vm454 = vcmp.le.f32.partialorder %v453, 0.7853982
    %vm455 = vcmp.lt.s32.totalorder %v136, 0
    %v456 = vand.u32 %v136, 2139095040
    %v457 = vshrl.u32 %v456, 23
    %v458 = vsub.s32 %v457, 127
    %v459 = vand.u32 2147483647, %v136
    %v460 = vand.u32 %v459, 8388607
    %v461 = vor.u32 %v460, 8388608
    %v462 = vsub.s32 0, %v461
    %v463 = vadd.s32 %v458, 1
    %vm464 = vcmp.gt.s32.totalorder %v463, 0
    %v465 = vsel %vm464, %v463, 0
    %v466 = vshrl.u32 %v465, 5
    %v467 = vand.u32 %v465, 31
    %v468 = vsub.s32 32, %v467
    %v469 = vshrl.u32 683565275, %v468
    %v470 = vshll.u32 683565275, %v467
    %v471 = vshrl.u32 2475754826, %v468
    %v472 = vor.u32 %v470, %v471
    %v473 = vshll.u32 2475754826, %v467
    %v474 = vshrl.u32 2131351028, %v468
    %v475 = vor.u32 %v473, %v474
    %v476 = vshll.u32 2131351028, %v467
    %v477 = vshrl.u32 2102212464, %v468
    %v478 = vor.u32 %v476, %v477
    %v479 = vshll.u32 2102212464, %v467
    %v480 = vshrl.u32 920167782, %v468
    %v481 = vor.u32 %v479, %v480
    %v482 = vshll.u32 920167782, %v467
    %v483 = vshrl.u32 1326507024, %v468
    %v484 = vor.u32 %v482, %v483
    %vm485 = vcmp.lt.s32.totalorder %v466, 1
    %vm486 = vcmp.lt.s32.totalorder %v466, 2
    %vm487 = vcmp.lt.s32.totalorder %v466, 3
    %vm488 = vcmp.lt.s32.totalorder %v466, 4
    %v489 = vsel %vm485, %v469, %v472
    %v490 = vsel %vm488, %v478, 2102212464
    %v491 = vsel %vm487, %v475, %v490
    %v492 = vsel %vm486, %v489, %v491
    %v493 = vsel %vm485, %v472, %v475
    %v494 = vsel %vm488, %v481, 920167782
    %v495 = vsel %vm487, %v478, %v494
    %v496 = vsel %vm486, %v493, %v495
    %v497 = vsel %vm485, %v475, %v478
    %v498 = vsel %vm488, %v484, 1326507024
    %v499 = vsel %vm487, %v481, %v498
    %v500 = vsel %vm486, %v497, %v499
    %v501 = vshll.u32 %v461, 8
    %v502 = vmul.u32.u64.compose %v501, %v500
    %v503 = vextract.low.u32 %v502
    %v504 = vextract.high.u32 %v502
    %v505 = vmul.u32.u64.compose %v501, %v496
    %v506 = vextract.low.u32 %v505
    %v507 = vextract.high.u32 %v505
    %v508 = vmul.u32 %v501, %v492
    %v509 = vadd.s32 %v504, %v506
    %vm510 = vc.u32 %v504, %v506
    %v511 = vadd.s32 %v507, 1
    %v512 = vsel %vm510, %v511, %v507
    %v513 = vadd.s32 %v508, %v512
    %v514 = vadd.s32 %v513, 536870912
    %v515 = vshrl.u32 %v514, 30
    %v516 = vshll.u32 %v515, 30
    %v517 = vsub.s32 %v513, %v516
    %vm518 = vcmp.lt.s32.totalorder %v517, 0
    %v519 = vsub.s32 0, %v517
    %v520 = vsel %vm518, %v519, %v517
    %v521 = vclz %v520
    %v522 = vsub.s32 %v521, 2
    %vm523 = vcmp.gt.s32.totalorder 0, %v522
    %v524 = vsel %vm523, 0, %v522
    %v525 = vsub.s32 32, %v524
    %v526 = vshll.u32 %v517, %v524
    %v527 = vshrl.u32 %v509, %v525
    %v528 = vor.u32 %v526, %v527
    %v529 = vsub.s32 4294967266, %v524
    %v530 = vadd.s32 %v529, 127
    %v531 = vshll.u32 %v530, 23
    %v532 = vor.u32 4788187, %v531
    %v533 = vand.u32 2147483647, %v532
    %v535 = vcvt.s32.f32 %v528
    %v536 = vmul.f32 %v535, %v533
    %v537 = vxor.u32 %v536, 2147483648
    %v538 = vsel %vm455, %v537, %v536
    %v539 = vsub.s32 4, %v515
    %v540 = vsel %vm455, %v539, %v515
    %v541 = vsel %vm454, %v136, %v538
    %v542 = vsel %vm454, 0, %v540
    %v543 = vcosq.f32.pop %v541
    %v544 = vsinq.f32.pop %v541
    %vm545 = vweird.f32 %v136
    %v546 = vadd.s32 %v542, 3
    %v547 = vand.u32 %v546, 3
    %vm548 = vcmp.lt.s32.totalorder %v547, 2
    %vm549 = vcmp.eq.s32.totalorder %v547, 0
    %v550 = vxor.u32 %v544, 2147483648
    %v551 = vsel %vm549, %v543, %v550
    %vm552 = vcmp.eq.s32.totalorder %v547, 2
    %v553 = vxor.u32 %v543, 2147483648
    %v554 = vsel %vm552, %v553, %v544
    %v555 = vsel %vm548, %v551, %v554
    %v556 = vsel %vm545, nan, %v555
    %v557 = vand.u32 2147483647, %v137
    %vm558 = vcmp.le.f32.partialorder %v557, 0.7853982
    %vm559 = vcmp.lt.s32.totalorder %v137, 0
    %v560 = vand.u32 %v137, 2139095040
    %v561 = vshrl.u32 %v560, 23
    %v562 = vsub.s32 %v561, 127
    %v563 = vand.u32 2147483647, %v137
    %v564 = vand.u32 %v563, 8388607
    %v565 = vor.u32 %v564, 8388608
    %v566 = vsub.s32 0, %v565
    %v567 = vadd.s32 %v562, 1
    %vm568 = vcmp.gt.s32.totalorder %v567, 0
    %v569 = vsel %vm568, %v567, 0
    %v570 = vshrl.u32 %v569, 5
    %v571 = vand.u32 %v569, 31
    %v572 = vsub.s32 32, %v571
    %v573 = vshrl.u32 683565275, %v572
    %v574 = vshll.u32 683565275, %v571
    %v575 = vshrl.u32 2475754826, %v572
    %v576 = vor.u32 %v574, %v575
    %v577 = vshll.u32 2475754826, %v571
    %v578 = vshrl.u32 2131351028, %v572
    %v579 = vor.u32 %v577, %v578
    %v580 = vshll.u32 2131351028, %v571
    %v581 = vshrl.u32 2102212464, %v572
    %v582 = vor.u32 %v580, %v581
    %v583 = vshll.u32 2102212464, %v571
    %v584 = vshrl.u32 920167782, %v572
    %v585 = vor.u32 %v583, %v584
    %v586 = vshll.u32 920167782, %v571
    %v587 = vshrl.u32 1326507024, %v572
    %v588 = vor.u32 %v586, %v587
    %vm589 = vcmp.lt.s32.totalorder %v570, 1
    %vm590 = vcmp.lt.s32.totalorder %v570, 2
    %vm591 = vcmp.lt.s32.totalorder %v570, 3
    %vm592 = vcmp.lt.s32.totalorder %v570, 4
    %v593 = vsel %vm589, %v573, %v576
    %v594 = vsel %vm592, %v582, 2102212464
    %v595 = vsel %vm591, %v579, %v594
    %v596 = vsel %vm590, %v593, %v595
    %v597 = vsel %vm589, %v576, %v579
    %v598 = vsel %vm592, %v585, 920167782
    %v599 = vsel %vm591, %v582, %v598
    %v600 = vsel %vm590, %v597, %v599
    %v601 = vsel %vm589, %v579, %v582
    %v602 = vsel %vm592, %v588, 1326507024
    %v603 = vsel %vm591, %v585, %v602
    %v604 = vsel %vm590, %v601, %v603
    %v605 = vshll.u32 %v565, 8
    %v606 = vmul.u32.u64.compose %v605, %v604
    %v607 = vextract.low.u32 %v606
    %v608 = vextract.high.u32 %v606
    %v609 = vmul.u32.u64.compose %v605, %v600
    %v610 = vextract.low.u32 %v609
    %v611 = vextract.high.u32 %v609
    %v612 = vmul.u32 %v605, %v596
    %v613 = vadd.s32 %v608, %v610
    %vm614 = vc.u32 %v608, %v610
    %v615 = vadd.s32 %v611, 1
    %v616 = vsel %vm614, %v615, %v611
    %v617 = vadd.s32 %v612, %v616
    %v618 = vadd.s32 %v617, 536870912
    %v619 = vshrl.u32 %v618, 30
    %v620 = vshll.u32 %v619, 30
    %v621 = vsub.s32 %v617, %v620
    %vm622 = vcmp.lt.s32.totalorder %v621, 0
    %v623 = vsub.s32 0, %v621
    %v624 = vsel %vm622, %v623, %v621
    %v625 = vclz %v624
    %v626 = vsub.s32 %v625, 2
    %vm627 = vcmp.gt.s32.totalorder 0, %v626
    %v628 = vsel %vm627, 0, %v626
    %v629 = vsub.s32 32, %v628
    %v630 = vshll.u32 %v621, %v628
    %v631 = vshrl.u32 %v613, %v629
    %v632 = vor.u32 %v630, %v631
    %v633 = vsub.s32 4294967266, %v628
    %v634 = vadd.s32 %v633, 127
    %v635 = vshll.u32 %v634, 23
    %v636 = vor.u32 4788187, %v635
    %v637 = vand.u32 2147483647, %v636
    %v639 = vcvt.s32.f32 %v632
    %v640 = vmul.f32 %v639, %v637
    %v641 = vxor.u32 %v640, 2147483648
    %v642 = vsel %vm559, %v641, %v640
    %v643 = vsub.s32 4, %v619
    %v644 = vsel %vm559, %v643, %v619
    %v645 = vsel %vm558, %v137, %v642
    %v646 = vsel %vm558, 0, %v644
    %v647 = vcosq.f32.pop %v645
    %v648 = vsinq.f32.pop %v645
    %vm649 = vweird.f32 %v137
    %v650 = vadd.s32 %v646, 3
    %v651 = vand.u32 %v650, 3
    %vm652 = vcmp.lt.s32.totalorder %v651, 2
    %vm653 = vcmp.eq.s32.totalorder %v651, 0
    %v654 = vxor.u32 %v648, 2147483648
    %v655 = vsel %vm653, %v647, %v654
    %vm656 = vcmp.eq.s32.totalorder %v651, 2
    %v657 = vxor.u32 %v647, 2147483648
    %v658 = vsel %vm656, %v657, %v648
    %v659 = vsel %vm652, %v655, %v658
    %v660 = vsel %vm649, nan, %v659
    %v661 = vand.u32 2147483647, %v138
    %vm662 = vcmp.le.f32.partialorder %v661, 0.7853982
    %vm663 = vcmp.lt.s32.totalorder %v138, 0
    %v664 = vand.u32 %v138, 2139095040
    %v665 = vshrl.u32 %v664, 23
    %v666 = vsub.s32 %v665, 127
    %v667 = vand.u32 2147483647, %v138
    %v668 = vand.u32 %v667, 8388607
    %v669 = vor.u32 %v668, 8388608
    %v670 = vsub.s32 0, %v669
    %v671 = vadd.s32 %v666, 1
    %vm672 = vcmp.gt.s32.totalorder %v671, 0
    %v673 = vsel %vm672, %v671, 0
    %v674 = vshrl.u32 %v673, 5
    %v675 = vand.u32 %v673, 31
    %v676 = vsub.s32 32, %v675
    %v677 = vshrl.u32 683565275, %v676
    %v678 = vshll.u32 683565275, %v675
    %v679 = vshrl.u32 2475754826, %v676
    %v680 = vor.u32 %v678, %v679
    %v681 = vshll.u32 2475754826, %v675
    %v682 = vshrl.u32 2131351028, %v676
    %v683 = vor.u32 %v681, %v682
    %v684 = vshll.u32 2131351028, %v675
    %v685 = vshrl.u32 2102212464, %v676
    %v686 = vor.u32 %v684, %v685
    %v687 = vshll.u32 2102212464, %v675
    %v688 = vshrl.u32 920167782, %v676
    %v689 = vor.u32 %v687, %v688
    %v690 = vshll.u32 920167782, %v675
    %v691 = vshrl.u32 1326507024, %v676
    %v692 = vor.u32 %v690, %v691
    %vm693 = vcmp.lt.s32.totalorder %v674, 1
    %vm694 = vcmp.lt.s32.totalorder %v674, 2
    %vm695 = vcmp.lt.s32.totalorder %v674, 3
    %vm696 = vcmp.lt.s32.totalorder %v674, 4
    %v697 = vsel %vm693, %v677, %v680
    %v698 = vsel %vm696, %v686, 2102212464
    %v699 = vsel %vm695, %v683, %v698
    %v700 = vsel %vm694, %v697, %v699
    %v701 = vsel %vm693, %v680, %v683
    %v702 = vsel %vm696, %v689, 920167782
    %v703 = vsel %vm695, %v686, %v702
    %v704 = vsel %vm694, %v701, %v703
    %v705 = vsel %vm693, %v683, %v686
    %v706 = vsel %vm696, %v692, 1326507024
    %v707 = vsel %vm695, %v689, %v706
    %v708 = vsel %vm694, %v705, %v707
    %v709 = vshll.u32 %v669, 8
    %v710 = vmul.u32.u64.compose %v709, %v708
    %v711 = vextract.low.u32 %v710
    %v712 = vextract.high.u32 %v710
    %v713 = vmul.u32.u64.compose %v709, %v704
    %v714 = vextract.low.u32 %v713
    %v715 = vextract.high.u32 %v713
    %v716 = vmul.u32 %v709, %v700
    %v717 = vadd.s32 %v712, %v714
    %vm718 = vc.u32 %v712, %v714
    %v719 = vadd.s32 %v715, 1
    %v720 = vsel %vm718, %v719, %v715
    %v721 = vadd.s32 %v716, %v720
    %v722 = vadd.s32 %v721, 536870912
    %v723 = vshrl.u32 %v722, 30
    %v724 = vshll.u32 %v723, 30
    %v725 = vsub.s32 %v721, %v724
    %vm726 = vcmp.lt.s32.totalorder %v725, 0
    %v727 = vsub.s32 0, %v725
    %v728 = vsel %vm726, %v727, %v725
    %v729 = vclz %v728
    %v730 = vsub.s32 %v729, 2
    %vm731 = vcmp.gt.s32.totalorder 0, %v730
    %v732 = vsel %vm731, 0, %v730
    %v733 = vsub.s32 32, %v732
    %v734 = vshll.u32 %v725, %v732
    %v735 = vshrl.u32 %v717, %v733
    %v736 = vor.u32 %v734, %v735
    %v737 = vsub.s32 4294967266, %v732
    %v738 = vadd.s32 %v737, 127
    %v739 = vshll.u32 %v738, 23
    %v740 = vor.u32 4788187, %v739
    %v741 = vand.u32 2147483647, %v740
    %v743 = vcvt.s32.f32 %v736
    %v744 = vmul.f32 %v743, %v741
    %v745 = vxor.u32 %v744, 2147483648
    %v746 = vsel %vm663, %v745, %v744
    %v747 = vsub.s32 4, %v723
    %v748 = vsel %vm663, %v747, %v723
    %v749 = vsel %vm662, %v138, %v746
    %v750 = vsel %vm662, 0, %v748
    %v751 = vcosq.f32.pop %v749
    %v752 = vsinq.f32.pop %v749
    %vm753 = vweird.f32 %v138
    %v754 = vadd.s32 %v750, 3
    %v755 = vand.u32 %v754, 3
    %vm756 = vcmp.lt.s32.totalorder %v755, 2
    %vm757 = vcmp.eq.s32.totalorder %v755, 0
    %v758 = vxor.u32 %v752, 2147483648
    %v759 = vsel %vm757, %v751, %v758
    %vm760 = vcmp.eq.s32.totalorder %v755, 2
    %v761 = vxor.u32 %v751, 2147483648
    %v762 = vsel %vm760, %v761, %v752
    %v763 = vsel %vm756, %v759, %v762
    %v764 = vsel %vm753, nan, %v763
    %v765 = vand.u32 2147483647, %v139
    %vm766 = vcmp.le.f32.partialorder %v765, 0.7853982
    %vm767 = vcmp.lt.s32.totalorder %v139, 0
    %v768 = vand.u32 %v139, 2139095040
    %v769 = vshrl.u32 %v768, 23
    %v770 = vsub.s32 %v769, 127
    %v771 = vand.u32 2147483647, %v139
    %v772 = vand.u32 %v771, 8388607
    %v773 = vor.u32 %v772, 8388608
    %v774 = vsub.s32 0, %v773
    %v775 = vadd.s32 %v770, 1
    %vm776 = vcmp.gt.s32.totalorder %v775, 0
    %v777 = vsel %vm776, %v775, 0
    %v778 = vshrl.u32 %v777, 5
    %v779 = vand.u32 %v777, 31
    %v780 = vsub.s32 32, %v779
    %v781 = vshrl.u32 683565275, %v780
    %v782 = vshll.u32 683565275, %v779
    %v783 = vshrl.u32 2475754826, %v780
    %v784 = vor.u32 %v782, %v783
    %v785 = vshll.u32 2475754826, %v779
    %v786 = vshrl.u32 2131351028, %v780
    %v787 = vor.u32 %v785, %v786
    %v788 = vshll.u32 2131351028, %v779
    %v789 = vshrl.u32 2102212464, %v780
    %v790 = vor.u32 %v788, %v789
    %v791 = vshll.u32 2102212464, %v779
    %v792 = vshrl.u32 920167782, %v780
    %v793 = vor.u32 %v791, %v792
    %v794 = vshll.u32 920167782, %v779
    %v795 = vshrl.u32 1326507024, %v780
    %v796 = vor.u32 %v794, %v795
    %vm797 = vcmp.lt.s32.totalorder %v778, 1
    %vm798 = vcmp.lt.s32.totalorder %v778, 2
    %vm799 = vcmp.lt.s32.totalorder %v778, 3
    %vm800 = vcmp.lt.s32.totalorder %v778, 4
    %v801 = vsel %vm797, %v781, %v784
    %v802 = vsel %vm800, %v790, 2102212464
    %v803 = vsel %vm799, %v787, %v802
    %v804 = vsel %vm798, %v801, %v803
    %v805 = vsel %vm797, %v784, %v787
    %v806 = vsel %vm800, %v793, 920167782
    %v807 = vsel %vm799, %v790, %v806
    %v808 = vsel %vm798, %v805, %v807
    %v809 = vsel %vm797, %v787, %v790
    %v810 = vsel %vm800, %v796, 1326507024
    %v811 = vsel %vm799, %v793, %v810
    %v812 = vsel %vm798, %v809, %v811
    %v813 = vshll.u32 %v773, 8
    %v814 = vmul.u32.u64.compose %v813, %v812
    %v815 = vextract.low.u32 %v814
    %v816 = vextract.high.u32 %v814
    %v817 = vmul.u32.u64.compose %v813, %v808
    %v818 = vextract.low.u32 %v817
    %v819 = vextract.high.u32 %v817
    %v820 = vmul.u32 %v813, %v804
    %v821 = vadd.s32 %v816, %v818
    %vm822 = vc.u32 %v816, %v818
    %v823 = vadd.s32 %v819, 1
    %v824 = vsel %vm822, %v823, %v819
    %v825 = vadd.s32 %v820, %v824
    %v826 = vadd.s32 %v825, 536870912
    %v827 = vshrl.u32 %v826, 30
    %v828 = vshll.u32 %v827, 30
    %v829 = vsub.s32 %v825, %v828
    %vm830 = vcmp.lt.s32.totalorder %v829, 0
    %v831 = vsub.s32 0, %v829
    %v832 = vsel %vm830, %v831, %v829
    %v833 = vclz %v832
    %v834 = vsub.s32 %v833, 2
    %vm835 = vcmp.gt.s32.totalorder 0, %v834
    %v836 = vsel %vm835, 0, %v834
    %v837 = vsub.s32 32, %v836
    %v838 = vshll.u32 %v829, %v836
    %v839 = vshrl.u32 %v821, %v837
    %v840 = vor.u32 %v838, %v839
    %v841 = vsub.s32 4294967266, %v836
    %v842 = vadd.s32 %v841, 127
    %v843 = vshll.u32 %v842, 23
    %v844 = vor.u32 4788187, %v843
    %v845 = vand.u32 2147483647, %v844
    %v847 = vcvt.s32.f32 %v840
    %v848 = vmul.f32 %v847, %v845
    %v849 = vxor.u32 %v848, 2147483648
    %v850 = vsel %vm767, %v849, %v848
    %v851 = vsub.s32 4, %v827
    %v852 = vsel %vm767, %v851, %v827
    %v853 = vsel %vm766, %v139, %v850
    %v854 = vsel %vm766, 0, %v852
    %v855 = vcosq.f32.pop %v853
    %v856 = vsinq.f32.pop %v853
    %vm857 = vweird.f32 %v139
    %v858 = vadd.s32 %v854, 3
    %v859 = vand.u32 %v858, 3
    %vm860 = vcmp.lt.s32.totalorder %v859, 2
    %vm861 = vcmp.eq.s32.totalorder %v859, 0
    %v862 = vxor.u32 %v856, 2147483648
    %v863 = vsel %vm861, %v855, %v862
    %vm864 = vcmp.eq.s32.totalorder %v859, 2
    %v865 = vxor.u32 %v855, 2147483648
    %v866 = vsel %vm864, %v865, %v856
    %v867 = vsel %vm860, %v863, %v866
    %v868 = vsel %vm857, nan, %v867
    %v869 = vand.u32 2147483647, %v140
    %vm870 = vcmp.le.f32.partialorder %v869, 0.7853982
    %vm871 = vcmp.lt.s32.totalorder %v140, 0
    %v872 = vand.u32 %v140, 2139095040
    %v873 = vshrl.u32 %v872, 23
    %v874 = vsub.s32 %v873, 127
    %v875 = vand.u32 2147483647, %v140
    %v876 = vand.u32 %v875, 8388607
    %v877 = vor.u32 %v876, 8388608
    %v878 = vsub.s32 0, %v877
    %v879 = vadd.s32 %v874, 1
    %vm880 = vcmp.gt.s32.totalorder %v879, 0
    %v881 = vsel %vm880, %v879, 0
    %v882 = vshrl.u32 %v881, 5
    %v883 = vand.u32 %v881, 31
    %v884 = vsub.s32 32, %v883
    %v885 = vshrl.u32 683565275, %v884
    %v886 = vshll.u32 683565275, %v883
    %v887 = vshrl.u32 2475754826, %v884
    %v888 = vor.u32 %v886, %v887
    %v889 = vshll.u32 2475754826, %v883
    %v890 = vshrl.u32 2131351028, %v884
    %v891 = vor.u32 %v889, %v890
    %v892 = vshll.u32 2131351028, %v883
    %v893 = vshrl.u32 2102212464, %v884
    %v894 = vor.u32 %v892, %v893
    %v895 = vshll.u32 2102212464, %v883
    %v896 = vshrl.u32 920167782, %v884
    %v897 = vor.u32 %v895, %v896
    %v898 = vshll.u32 920167782, %v883
    %v899 = vshrl.u32 1326507024, %v884
    %v900 = vor.u32 %v898, %v899
    %vm901 = vcmp.lt.s32.totalorder %v882, 1
    %vm902 = vcmp.lt.s32.totalorder %v882, 2
    %vm903 = vcmp.lt.s32.totalorder %v882, 3
    %vm904 = vcmp.lt.s32.totalorder %v882, 4
    %v905 = vsel %vm901, %v885, %v888
    %v906 = vsel %vm904, %v894, 2102212464
    %v907 = vsel %vm903, %v891, %v906
    %v908 = vsel %vm902, %v905, %v907
    %v909 = vsel %vm901, %v888, %v891
    %v910 = vsel %vm904, %v897, 920167782
    %v911 = vsel %vm903, %v894, %v910
    %v912 = vsel %vm902, %v909, %v911
    %v913 = vsel %vm901, %v891, %v894
    %v914 = vsel %vm904, %v900, 1326507024
    %v915 = vsel %vm903, %v897, %v914
    %v916 = vsel %vm902, %v913, %v915
    %v917 = vshll.u32 %v877, 8
    %v918 = vmul.u32.u64.compose %v917, %v916
    %v919 = vextract.low.u32 %v918
    %v920 = vextract.high.u32 %v918
    %v921 = vmul.u32.u64.compose %v917, %v912
    %v922 = vextract.low.u32 %v921
    %v923 = vextract.high.u32 %v921
    %v924 = vmul.u32 %v917, %v908
    %v925 = vadd.s32 %v920, %v922
    %vm926 = vc.u32 %v920, %v922
    %v927 = vadd.s32 %v923, 1
    %v928 = vsel %vm926, %v927, %v923
    %v929 = vadd.s32 %v924, %v928
    %v930 = vadd.s32 %v929, 536870912
    %v931 = vshrl.u32 %v930, 30
    %v932 = vshll.u32 %v931, 30
    %v933 = vsub.s32 %v929, %v932
    %vm934 = vcmp.lt.s32.totalorder %v933, 0
    %v935 = vsub.s32 0, %v933
    %v936 = vsel %vm934, %v935, %v933
    %v937 = vclz %v936
    %v938 = vsub.s32 %v937, 2
    %vm939 = vcmp.gt.s32.totalorder 0, %v938
    %v940 = vsel %vm939, 0, %v938
    %v941 = vsub.s32 32, %v940
    %v942 = vshll.u32 %v933, %v940
    %v943 = vshrl.u32 %v925, %v941
    %v944 = vor.u32 %v942, %v943
    %v945 = vsub.s32 4294967266, %v940
    %v946 = vadd.s32 %v945, 127
    %v947 = vshll.u32 %v946, 23
    %v948 = vor.u32 4788187, %v947
    %v949 = vand.u32 2147483647, %v948
    %v951 = vcvt.s32.f32 %v944
    %v952 = vmul.f32 %v951, %v949
    %v953 = vxor.u32 %v952, 2147483648
    %v954 = vsel %vm871, %v953, %v952
    %v955 = vsub.s32 4, %v931
    %v956 = vsel %vm871, %v955, %v931
    %v957 = vsel %vm870, %v140, %v954
    %v958 = vsel %vm870, 0, %v956
    %v959 = vcosq.f32.pop %v957
    %v960 = vsinq.f32.pop %v957
    %vm961 = vweird.f32 %v140
    %v962 = vadd.s32 %v958, 3
    %v963 = vand.u32 %v962, 3
    %vm964 = vcmp.lt.s32.totalorder %v963, 2
    %vm965 = vcmp.eq.s32.totalorder %v963, 0
    %v966 = vxor.u32 %v960, 2147483648
    %v967 = vsel %vm965, %v959, %v966
    %vm968 = vcmp.eq.s32.totalorder %v963, 2
    %v969 = vxor.u32 %v959, 2147483648
    %v970 = vsel %vm968, %v969, %v960
    %v971 = vsel %vm964, %v967, %v970
    %v972 = vsel %vm961, nan, %v971
    %v973 = vld [vmem:[%s3] sm:$0xff]
    %v974 = vld [vmem:[%s3 + $0x8] sm:$0xff]
    %v975 = vld [vmem:[%s3 + $0x10] sm:$0xff]
    %v976 = vld [vmem:[%s3 + $0x18] sm:$0xff]
    %978 = vset.pattern.permute.xlu0 0
    %979 = vperm.xlu0 %978, %v973
    %v980 = vpop.permute.xlu0 %979
    %983 = vset.pattern.permute.xlu0 0
    %984 = vperm.xlu0 %983, %v974
    %v985 = vpop.permute.xlu0 %984
    %988 = vset.pattern.permute.xlu0 0
    %989 = vperm.xlu0 %988, %v975
    %v990 = vpop.permute.xlu0 %989
    %993 = vset.pattern.permute.xlu0 0
    %994 = vperm.xlu0 %993, %v976
    %v995 = vpop.permute.xlu0 %994
    %v997 = vlaneseq
    %v998 = vshrl.u32 %v997, 7
    %v999 = vsub.s32 0, %v998
    %v1000 = vrot.slane %v37, %v999
    %v1001 = vmul.f32 %v980, %v1000
    %v1002 = vmul.f32 %v985, %v1000
    %v1003 = vmul.f32 %v990, %v1000
    %v1004 = vmul.f32 %v995, %v1000
    %1005 = vset.pattern.permute.xlu0 1
    %1006 = vperm.xlu0 %1005, %v973
    %v1007 = vpop.permute.xlu0 %1006
    %1009 = vset.pattern.permute.xlu0 1
    %1010 = vperm.xlu0 %1009, %v974
    %v1011 = vpop.permute.xlu0 %1010
    %1013 = vset.pattern.permute.xlu0 1
    %1014 = vperm.xlu0 %1013, %v975
    %v1015 = vpop.permute.xlu0 %1014
    %1017 = vset.pattern.permute.xlu0 1
    %1018 = vperm.xlu0 %1017, %v976
    %v1019 = vpop.permute.xlu0 %1018
    %v1021 = vlaneseq
    %v1022 = vshrl.u32 %v1021, 7
    %v1023 = vsub.s32 1, %v1022
    %v1024 = vrot.slane %v37, %v1023
    %v1025 = vmul.f32 %v1007, %v1024
    %v1026 = vmul.f32 %v1011, %v1024
    %v1027 = vmul.f32 %v1015, %v1024
    %v1028 = vmul.f32 %v1019, %v1024
    %v1029 = vadd.f32 %v1001, %v1025
    %v1030 = vadd.f32 %v1002, %v1026
    %v1031 = vadd.f32 %v1003, %v1027
    %v1032 = vadd.f32 %v1004, %v1028
    %v1033 = vld [vmem:[%s4] sm:$0xf]
    %v1034 = vld [vmem:[%s4 + $0x4] sm:$0xf]
    %v1035 = vld [vmem:[%s4 + $0x8] sm:$0xf]
    %v1036 = vld [vmem:[%s4 + $0xc] sm:$0xf]
    %v1037 = vpack.c.bf16 %v348, %v244
    %v1038 = vpack.c.bf16 %v556, %v452
    %v1039 = vpack.c.bf16 %v764, %v660
    %v1040 = vpack.c.bf16 %v972, %v868
    %v1045 = vunpack.c.l.b16 %v1033
    %v1046 = vunpack.c.l.b16 %v1034
    %v1047 = vunpack.c.l.b16 %v1035
    %v1048 = vunpack.c.l.b16 %v1036
    %v1049 = vpack.c.b16 %v1046, %v1045
    %v1050 = vpack.c.b16 %v1048, %v1047
    %vm1051 = vcmask 523264
    %v1053 = vsel %vm1051, %v1049, 0
    %v1056 = vsel %vm1051, %v1050, 0
    %1058 = vmatprep.subr.bf16.mxu0 0
    %1059 = vmatpush1.bf16.msra.mxu0 %v1037
    %1060 = vmatprep.subr.bf16.mxu0 0
    %1061 = vmatpush1.bf16.msra.mxu0 %v1038
    %1062 = vmatprep.subr.bf16.mxu0 0
    %1063 = vmatpush1.bf16.msra.mxu0 %v1039
    %1064 = vmatprep.subr.bf16.mxu0 0
    %1065 = vmatpush1.bf16.msra.mxu0 %v1040
    %1066 = vmatprep.subr.bf16.mxu0 0
    %1067 = vmatpush1.bf16.msra.mxu0 0
    %1068 = vmatprep.subr.bf16.mxu0 0
    %1069 = vmatpush1.bf16.msra.mxu0 0
    %1070 = vmatprep.subr.bf16.mxu0 0
    %1071 = vmatpush1.bf16.msra.mxu0 0
    %1072 = vmatprep.subr.bf16.mxu0 0
    %1073 = vmatpush1.bf16.msra.mxu0 0
    %1074 = vmatprep.subr.bf16.mxu0 0
    %1075 = vmatpush1.bf16.msra.mxu0 0
    %1076 = vmatprep.subr.bf16.mxu0 0
    %1077 = vmatpush1.bf16.msra.mxu0 0
    %1078 = vmatprep.subr.bf16.mxu0 0
    %1079 = vmatpush1.bf16.msra.mxu0 0
    %1080 = vmatprep.subr.bf16.mxu0 0
    %1081 = vmatpush1.bf16.msra.mxu0 0
    %1082 = vmatprep.subr.bf16.mxu0 0
    %1083 = vmatpush1.bf16.msra.mxu0 0
    %1084 = vmatprep.subr.bf16.mxu0 0
    %1085 = vmatpush1.bf16.msra.mxu0 0
    %1086 = vmatprep.subr.bf16.mxu0 0
    %1087 = vmatpush1.bf16.msra.mxu0 0
    %1088 = vmatprep.subr.bf16.mxu0 0
    %1089 = vmatpush1.bf16.msra.mxu0 0
    %1090 = vmatprep.mubr.bf16.mxu0 0
    %1091 = vmatmul.mubr.bf16.gmra.mrb[0].mxu0 %v1053
    %v1092 = vpop.f32.mrb[0].mxu0
    %v1093 = vadd.f32 0.0, %v1092
    %v1094 = vpop.f32.mrb[0].mxu0
    %v1095 = vpop.f32.mrb[0].mxu0
    %v1096 = vadd.f32 0.0, %v1095
    %v1097 = vpop.f32.mrb[0].mxu0
    %1098 = vmatprep.mubr.bf16.mxu0 0
    %1099 = vmatmul.mubr.bf16.gmra.mrb[0].mxu0 %v1056
    %v1100 = vpop.f32.mrb[0].mxu0
    %v1101 = vadd.f32 0.0, %v1100
    %v1102 = vpop.f32.mrb[0].mxu0
    %v1103 = vpop.f32.mrb[0].mxu0
    %v1104 = vadd.f32 0.0, %v1103
    %v1105 = vpop.f32.mrb[0].mxu0
    %1106 = vdwg.mxu0
    %v1107 = vadd.f32 %v1029, %v1093
    %v1108 = vadd.f32 %v1030, %v1096
    %v1109 = vadd.f32 %v1031, %v1101
    %v1110 = vadd.f32 %v1032, %v1104
    %v1111 = vld [vmem:[%s5] sm:$0xff]
    %v1112 = vld [vmem:[%s5 + $0x8] sm:$0xff]
    %v1113 = vld [vmem:[%s5 + $0x10] sm:$0xff]
    %v1114 = vld [vmem:[%s5 + $0x18] sm:$0xff]
    %1116 = vset.pattern.permute.xlu0 0
    %1117 = vperm.xlu0 %1116, %v1111
    %v1118 = vpop.permute.xlu0 %1117
    %1121 = vset.pattern.permute.xlu0 0
    %1122 = vperm.xlu0 %1121, %v1112
    %v1123 = vpop.permute.xlu0 %1122
    %1126 = vset.pattern.permute.xlu0 0
    %1127 = vperm.xlu0 %1126, %v1113
    %v1128 = vpop.permute.xlu0 %1127
    %1131 = vset.pattern.permute.xlu0 0
    %1132 = vperm.xlu0 %1131, %v1114
    %v1133 = vpop.permute.xlu0 %1132
    %v1135 = vadd.f32 %v1107, %v1118
    %v1136 = vadd.f32 %v1108, %v1123
    %v1137 = vadd.f32 %v1109, %v1128
    %v1138 = vadd.f32 %v1110, %v1133
    %v1139 = vmax.f32 %v1135, 0.0
    %v1140 = vmax.f32 %v1136, 0.0
    %v1141 = vmax.f32 %v1137, 0.0
    %v1142 = vmax.f32 %v1138, 0.0
    %v1143 = vld [vmem:[%s6] sm:$0xf]
    %v1144 = vld [vmem:[%s6 + $0x4] sm:$0xf]
    %v1145 = vld [vmem:[%s6 + $0x8] sm:$0xf]
    %v1146 = vld [vmem:[%s6 + $0xc] sm:$0xf]
    %v1147 = vld [vmem:[%s7] sm:$0xff]
    %v1148 = vld [vmem:[%s7 + $0x8] sm:$0xff]
    %v1149 = vld [vmem:[%s7 + $0x10] sm:$0xff]
    %v1150 = vld [vmem:[%s7 + $0x18] sm:$0xff]
    %v1151 = vpack.c.bf16 %v1140, %v1139
    %v1152 = vpack.c.bf16 %v1142, %v1141
    %1154 = vset.pattern.permute.xlu0 0
    %1155 = vperm.xlu0 %1154, %v1147
    %v1156 = vpop.permute.xlu0 %1155
    %1159 = vset.pattern.permute.xlu0 0
    %1160 = vperm.xlu0 %1159, %v1148
    %v1161 = vpop.permute.xlu0 %1160
    %1164 = vset.pattern.permute.xlu0 0
    %1165 = vperm.xlu0 %1164, %v1149
    %v1166 = vpop.permute.xlu0 %1165
    %1169 = vset.pattern.permute.xlu0 0
    %1170 = vperm.xlu0 %1169, %v1150
    %v1171 = vpop.permute.xlu0 %1170
    %v1177 = vunpack.c.l.b16 %v1143
    %v1178 = vunpack.c.l.b16 %v1144
    %v1179 = vunpack.c.l.b16 %v1145
    %v1180 = vunpack.c.l.b16 %v1146
    %v1181 = vpack.c.b16 %v1178, %v1177
    %v1182 = vpack.c.b16 %v1180, %v1179
    %vm1183 = vcmask 261120
    %v1185 = vsel %vm1183, %v1181, 0
    %v1188 = vsel %vm1183, %v1182, 0
    %1190 = vmatprep.subr.bf16.mxu0 0
    %1191 = vmatpush1.bf16.msra.mxu0 %v1151
    %1192 = vmatprep.subr.bf16.mxu0 0
    %1193 = vmatpush1.bf16.msra.mxu0 %v1152
    %1194 = vmatprep.subr.bf16.mxu0 0
    %1195 = vmatpush1.bf16.msra.mxu0 0
    %1196 = vmatprep.subr.bf16.mxu0 0
    %1197 = vmatpush1.bf16.msra.mxu0 0
    %1198 = vmatprep.subr.bf16.mxu0 0
    %1199 = vmatpush1.bf16.msra.mxu0 0
    %1200 = vmatprep.subr.bf16.mxu0 0
    %1201 = vmatpush1.bf16.msra.mxu0 0
    %1202 = vmatprep.subr.bf16.mxu0 0
    %1203 = vmatpush1.bf16.msra.mxu0 0
    %1204 = vmatprep.subr.bf16.mxu0 0
    %1205 = vmatpush1.bf16.msra.mxu0 0
    %1206 = vmatprep.subr.bf16.mxu0 0
    %1207 = vmatpush1.bf16.msra.mxu0 0
    %1208 = vmatprep.subr.bf16.mxu0 0
    %1209 = vmatpush1.bf16.msra.mxu0 0
    %1210 = vmatprep.subr.bf16.mxu0 0
    %1211 = vmatpush1.bf16.msra.mxu0 0
    %1212 = vmatprep.subr.bf16.mxu0 0
    %1213 = vmatpush1.bf16.msra.mxu0 0
    %1214 = vmatprep.subr.bf16.mxu0 0
    %1215 = vmatpush1.bf16.msra.mxu0 0
    %1216 = vmatprep.subr.bf16.mxu0 0
    %1217 = vmatpush1.bf16.msra.mxu0 0
    %1218 = vmatprep.subr.bf16.mxu0 0
    %1219 = vmatpush1.bf16.msra.mxu0 0
    %1220 = vmatprep.subr.bf16.mxu0 0
    %1221 = vmatpush1.bf16.msra.mxu0 0
    %1222 = vmatprep.mubr.bf16.mxu0 0
    %1223 = vmatmul.mubr.bf16.gmra.mrb[0].mxu0 %v1185
    %v1224 = vpop.f32.mrb[0].mxu0
    %v1225 = vadd.f32 %v1156, %v1224
    %v1226 = vpop.f32.mrb[0].mxu0
    %v1227 = vpop.f32.mrb[0].mxu0
    %v1228 = vadd.f32 %v1161, %v1227
    %v1229 = vpop.f32.mrb[0].mxu0
    %1230 = vmatprep.mubr.bf16.mxu0 0
    %1231 = vmatmul.mubr.bf16.gmra.mrb[0].mxu0 %v1188
    %v1232 = vpop.f32.mrb[0].mxu0
    %v1233 = vadd.f32 %v1166, %v1232
    %v1234 = vpop.f32.mrb[0].mxu0
    %v1235 = vpop.f32.mrb[0].mxu0
    %v1236 = vadd.f32 %v1171, %v1235
    %v1237 = vpop.f32.mrb[0].mxu0
    %1238 = vdwg.mxu0
    %v1239 = vmax.f32 %v1225, 0.0
    %v1240 = vmax.f32 %v1228, 0.0
    %v1241 = vmax.f32 %v1233, 0.0
    %v1242 = vmax.f32 %v1236, 0.0
    %v1243 = vld [vmem:[%s8] sm:$0x1]
    %v1244 = vld [vmem:[%s9] sm:$0x3]
    %v1245 = vpack.c.bf16 %v1240, %v1239
    %v1246 = vpack.c.bf16 %v1242, %v1241
    %1248 = vset.pattern.permute.xlu0 0
    %1249 = vperm.xlu0 %1248, %v1244
    %v1250 = vpop.permute.xlu0 %1249
    %v1253 = vsel %vm1183, %v1243, 0
    %1255 = vmatprep.subr.bf16.mxu0 0
    %1256 = vmatpush1.bf16.msra.mxu0 %v1245
    %1257 = vmatprep.subr.bf16.mxu0 0
    %1258 = vmatpush1.bf16.msra.mxu0 %v1246
    %1259 = vmatprep.subr.bf16.mxu0 0
    %1260 = vmatpush1.bf16.msra.mxu0 0
    %1261 = vmatprep.subr.bf16.mxu0 0
    %1262 = vmatpush1.bf16.msra.mxu0 0
    %1263 = vmatprep.subr.bf16.mxu0 0
    %1264 = vmatpush1.bf16.msra.mxu0 0
    %1265 = vmatprep.subr.bf16.mxu0 0
    %1266 = vmatpush1.bf16.msra.mxu0 0
    %1267 = vmatprep.subr.bf16.mxu0 0
    %1268 = vmatpush1.bf16.msra.mxu0 0
    %1269 = vmatprep.subr.bf16.mxu0 0
    %1270 = vmatpush1.bf16.msra.mxu0 0
    %1271 = vmatprep.subr.bf16.mxu0 0
    %1272 = vmatpush1.bf16.msra.mxu0 0
    %1273 = vmatprep.subr.bf16.mxu0 0
    %1274 = vmatpush1.bf16.msra.mxu0 0
    %1275 = vmatprep.subr.bf16.mxu0 0
    %1276 = vmatpush1.bf16.msra.mxu0 0
    %1277 = vmatprep.subr.bf16.mxu0 0
    %1278 = vmatpush1.bf16.msra.mxu0 0
    %1279 = vmatprep.subr.bf16.mxu0 0
    %1280 = vmatpush1.bf16.msra.mxu0 0
    %1281 = vmatprep.subr.bf16.mxu0 0
    %1282 = vmatpush1.bf16.msra.mxu0 0
    %1283 = vmatprep.subr.bf16.mxu0 0
    %1284 = vmatpush1.bf16.msra.mxu0 0
    %1285 = vmatprep.subr.bf16.mxu0 0
    %1286 = vmatpush1.bf16.msra.mxu0 0
    %1287 = vmatprep.mubr.bf16.mxu0 0
    %1288 = vmatmul.mubr.bf16.gmra.mrb[0].mxu0 %v1253
    %v1289 = vpop.f32.mrb[0].mxu0
    %v1290 = vadd.f32 %v1250, %v1289
    %v1291 = vpop.f32.mrb[0].mxu0
    %v1292 = vpop.f32.mrb[0].mxu0
    %v1293 = vpop.f32.mrb[0].mxu0
    %1294 = vdwg.mxu0
    %1295 = vst [vmem:[#allocation2] sm:$0x3] %v1290
    // Predicated region
    $region42: #{tpu_custom_call.1} parent=1 // pred_check
      _
    $region43: #{tpu_custom_call.1} parent=1 // pred_check_branch
      %1297 = sbr.rel (0) target = $region45
    $region44: #{tpu_custom_call.1} parent=1 // pred_region
      %s1299 = ssub.s32 32, 32
      %1300 = vsyncadd [#allocation3], %s1299
      %s1302 = sshll.u32 [#allocation2], 4
      %s1303 = int_to_ptr.vmem [resolvable:$true] %s1302
      %1305 = dma.vmem_to_hbm [thread:$0]  %s1303, 32, %s10, [#allocation3]
    $region45: #{tpu_custom_call.1} parent=1 // pred_fallthru
      _
    // Predicated region
    $region46: #{tpu_custom_call.1} parent=1 // pred_check
      _
    $region47: #{tpu_custom_call.1} parent=1 // pred_check_branch
      %1307 = sbr.rel (0) target = $region49
    $region48: #{tpu_custom_call.1} parent=1 // pred_region
      %1308 = dma.done [#allocation3], 32
    $region49: #{tpu_custom_call.1} parent=1 // pred_fallthru
      _
    %1309 = vsyncpa [#allocation3], 1

</llo_original>
